<compile_context>
chip_gen: v5e
topology: v5e:2x2
jax: 0.10.0
libtpu: 0.0.40
codegen_flags: <defaults>
</compile_context>

<pallas_src>
from math import ceil, floor

import numpy as np
import jax
import jax.numpy as jnp
from jax import lax
from jax.experimental import pallas as pl
from jax.experimental.pallas import tpu as pltpu


# ---------------------------------------------------------------------------
# Static pooling geometry (identical to the torch forward).
# ---------------------------------------------------------------------------
def _level_params(H, W, num_level):
    params = []
    for i in range(num_level):
        level = i + 1
        kh, kw = ceil(H / level), ceil(W / level)
        sh, sw = kh, kw
        ph = floor((kh * level - H + 1) / 2)
        pw = floor((kw * level - W + 1) / 2)
        oh = (H + 2 * ph - kh) // sh + 1
        ow = (W + 2 * pw - kw) // sw + 1
        params.append((kh, kw, sh, sw, ph, pw, oh, ow))
    return params


def _window_bounds(params, H, W):
    """Per output cell (level-major, row-major, col-major): clipped window."""
    bounds = []
    for (kh, kw, sh, sw, ph, pw, oh, ow) in params:
        for io in range(oh):
            h0, h1 = max(io * sh - ph, 0), min(io * sh - ph + kh, H)
            assert h1 > h0, f"empty pooling window rows (H={H} too small for num_level)"
            for jo in range(ow):
                w0, w1 = max(jo * sw - pw, 0), min(jo * sw - pw + kw, W)
                assert w1 > w0, f"empty pooling window cols (W={W} too small for num_level)"
                bounds.append((h0, h1, w0, w1))
    return bounds


def _build_membership(params, H, W):
    """(G, H*W) f32 exact 0/1 matrix: 1.0 where pixel h*W+w belongs to window g."""
    bounds = _window_bounds(params, H, W)
    m = np.zeros((len(bounds), H * W), np.float32)
    for g, (h0, h1, w0, w1) in enumerate(bounds):
        for h in range(h0, h1):
            m[g, h * W + w0:h * W + w1] = 1.0
    return jnp.asarray(m)


# ---------------------------------------------------------------------------
# Kernels (one channel tile per grid step, lane-dense (TC, HW) input block).
# ---------------------------------------------------------------------------
def _make_max_kernel(params, H, W):
    # Static geometry: one entry per output row-group with its clipped row range
    # and the level's clipped column groups.  Output order is level-major, then
    # output row, then output col -> matches torch's per-level .view(N, -1).
    groups = []
    for (kh, kw, sh, sw, ph, pw, oh, ow) in params:
        cols = []
        for jo in range(ow):
            w0, w1 = max(jo * sw - pw, 0), min(jo * sw - pw + kw, W)
            assert w1 > w0, "empty pooling window"
            cols.append((w0, w1))
        for io in range(oh):
            h0, h1 = max(io * sh - ph, 0), min(io * sh - ph + kh, H)
            assert h1 > h0, "empty pooling window"
            groups.append((h0, h1, cols))

    def kernel(x_ref, o_ref):
        # x_ref: (TC, H*W) lane-dense channel tile; o_ref: (TC, G).
        pieces = []
        for (h0, h1, cols) in groups:
            # Elementwise max across the rows of this output row-group.  Torch
            # pads with -inf, so reducing only the clipped rows/cols is exact
            # and needs no sentinel (works for integer dtypes as well).
            rows = [x_ref[:, h * W:(h + 1) * W] for h in range(h0, h1)]
            while len(rows) > 1:                     # pairwise tree: same op count, shorter deps
                nxt = [jnp.maximum(rows[i], rows[i + 1])
                       for i in range(0, len(rows) - 1, 2)]
                if len(rows) % 2:
                    nxt.append(rows[-1])
                rows = nxt
            rmax = rows[0]                           # (TC, W)
            for (w0, w1) in cols:                    # tiny lane reduce per window
                pieces.append(jnp.max(rmax[:, w0:w1], axis=-1, keepdims=True))
        o_ref[...] = jnp.concatenate(pieces, axis=-1).astype(o_ref.dtype)

    return kernel


def _make_avg_kernel(level_sizes, level_areas):
    def kernel(m_ref, x_ref, o_ref):
        # m_ref: (G, HW) exact 0/1 membership; x_ref: (TC, HW); o_ref: (G, TC).
        x = x_ref[...].astype(jnp.float32)
        # (G, HW) . (TC, HW)^T -> (G, TC): channels land on the lane axis, so the
        # output store is lane-dense with no in-kernel transpose.  0/1 weights are
        # exact in bf16, so HIGH precision keeps ~f32 accuracy at fewer MXU passes.
        acc = lax.dot_general(m_ref[...], x, (((1,), (1,)), ((), ())),
                              preferred_element_type=jnp.float32,
                              precision=lax.Precision.HIGH)
        off = 0
        for g, area in zip(level_sizes, level_areas):
            # torch count_include_pad=True: always divide by the full kernel area.
            o_ref[off:off + g, :] = (acc[off:off + g, :]
                                     * (1.0 / float(area))).astype(o_ref.dtype)
            off += g

    return kernel


# ---------------------------------------------------------------------------
# Generation-aware tiling / VMEM budgeting.
# ---------------------------------------------------------------------------
def _vmem_capacity_bytes():
    try:
        return int(pltpu.get_tpu_info().vmem_capacity_bytes)
    except Exception:       # conservative fallback: v7x per-TensorCore capacity
        return 64 << 20


def _choose_tile_and_vmem(N, C, HW, G, itemsize, pool_type):
    """Largest channel tile whose blocks fit the generation-aware VMEM budget."""
    cap = _vmem_capacity_bytes()
    # ~64 MiB on v5e/v6e (128 MiB physical), ~38 MiB on v7x (64 MiB physical).
    budget = min(int(cap * 0.60), 64 << 20)
    pad = lambda v, m: -(-v // m) * m

    def need(tc):
        in_blk = pad(tc, 8) * pad(HW, 128) * itemsize               # input block
        if pool_type == 'max_pool':
            out_blk = pad(tc, 8) * pad(G, 128) * itemsize           # (TC, G) output block
            aux = 0
            tmp = pad(tc, 8) * pad(HW, 128) * max(itemsize, 4)      # live row slices / partial maxima
        else:
            out_blk = pad(G, 8) * pad(tc, 128) * itemsize           # lane-dense (G, TC) output block
            aux = 2 * pad(G, 8) * pad(HW, 128) * 4                  # resident 0/1 membership matrix
            tmp = pad(tc, 8) * pad(HW, 128) * 4                     # f32 copy of x for the MXU
        return 2 * in_blk + 2 * out_blk + aux + tmp                 # double-buffered blocks + temps

    if pool_type == 'max_pool':
        cands = [c for c in (512, 256, 128, 64, 32, 16, 8) if c <= C]
    else:
        # keep the (G, TC) output block's lane dim 128-aligned
        cands = [c for c in (512, 256, 128) if c <= C]
    if not cands:
        cands = [C]
    tc = next((c for c in cands if need(c) <= budget), cands[-1])

    # Keep enough grid steps for pipeline depth / both v7x TensorCores.
    while N * (-(-C // tc)) < 8:
        smaller = [c for c in cands if c < tc]
        if not smaller:
            break
        tc = smaller[0]

    vmem_limit = int(min(max(budget, int(need(tc) * 1.25)), int(cap * 0.9)))
    return tc, vmem_limit


# ---------------------------------------------------------------------------
# Public wrapper (== SpatialPyramidPooling2d(num_level, pool_type)(x), NCHW).
# ---------------------------------------------------------------------------
def spatial_pyramid_pooling_2d(x, num_level, pool_type='max_pool'):
    N, C, H, W = x.shape
    params = _level_params(H, W, num_level)
    sizes = [oh * ow for (*_, oh, ow) in params]
    areas = [kh * kw for (kh, kw, *_rest) in params]
    G, HW = sum(sizes), H * W

    # Lane-dense input view: H*W becomes the 128-lane axis (free reshape in HBM).
    x_flat = x.reshape(N, C, HW)
    itemsize = jnp.dtype(x.dtype).itemsize
    TC, vmem_limit = _choose_tile_and_vmem(N, C, HW, G, itemsize, pool_type)
    grid = (N, pl.cdiv(C, TC))
    # TODO(synk): for very large feature maps (H*W >> 10^4) an extra "arbitrary"
    # HW-tile grid axis with partial-max / partial-matmul accumulation would keep
    # tiles large; here the channel tile is shrunk instead so blocks always fit.
    cparams = pltpu.CompilerParams(
        dimension_semantics=("parallel", "parallel"),
        vmem_limit_bytes=vmem_limit)

    if pool_type == 'max_pool':
        out3 = pl.pallas_call(
            _make_max_kernel(params, H, W),
            out_shape=jax.ShapeDtypeStruct((N, C, G), x.dtype),
            grid=grid,
            in_specs=[pl.BlockSpec((None, TC, HW), lambda n, c: (n, c, 0))],
            out_specs=pl.BlockSpec((None, TC, G), lambda n, c: (n, c, 0)),
            compiler_params=cparams,
        )(x_flat)
        pieces, off = [], 0
        for g in sizes:
            pieces.append(out3[:, :, off:off + g].reshape(N, C * g))
            off += g
        return jnp.concatenate(pieces, axis=1)

    # avg_pool
    # TODO(synk): integer avg_pool would need torch's integer rounding; here the
    # accumulation is f32 and cast back (matches torch for floating dtypes).
    member = _build_membership(params, H, W)                   # (G, HW) exact 0/1
    out3 = pl.pallas_call(
        _make_avg_kernel(sizes, areas),
        out_shape=jax.ShapeDtypeStruct((N, G, C), x.dtype),    # lane-dense: C on lanes
        grid=grid,
        in_specs=[pl.BlockSpec((G, HW), lambda n, c: (0, 0)),  # resident aux
                  pl.BlockSpec((None, TC, HW), lambda n, c: (n, c, 0))],
        out_specs=pl.BlockSpec((None, G, TC), lambda n, c: (n, 0, c)),
        compiler_params=cparams,
    )(member, x_flat)
    pieces, off = [], 0
    for g in sizes:
        # (N, g, C) -> (N, C, g) -> (N, C*g): tiny glue on the pooled result only.
        pieces.append(jnp.transpose(out3[:, off:off + g, :], (0, 2, 1)).reshape(N, C * g))
        off += g
    return jnp.concatenate(pieces, axis=1)


# ---------------------------------------------------------------------------
# Independent pure-JAX reference (lax.reduce_window) and self-test.
# ---------------------------------------------------------------------------
def _spp_reference(x, num_level, pool_type='max_pool'):
    N, C, H, W = x.shape
    outs = []
    for (kh, kw, sh, sw, ph, pw, oh, ow) in _level_params(H, W, num_level):
        pad = ((0, 0), (0, 0), (ph, ph), (pw, pw))
        if pool_type == 'max_pool':
            if jnp.issubdtype(x.dtype, jnp.floating):
                init = jnp.asarray(-jnp.inf, x.dtype)
            else:
                init = jnp.asarray(jnp.iinfo(x.dtype).min, x.dtype)
            r = lax.reduce_window(x, init, lax.max,
                                  (1, 1, kh, kw), (1, 1, sh, sw), pad)
        else:
            s = lax.reduce_window(x.astype(jnp.float32), 0.0, lax.add,
                                  (1, 1, kh, kw), (1, 1, sh, sw), pad)
            r = (s / float(kh * kw)).astype(x.dtype)
        outs.append(r.reshape(N, -1))
    return jnp.concatenate(outs, axis=1)


if __name__ == "__main__":
    key = jax.random.PRNGKey(0)
    N, C, H, W = 2, 4, 16, 16
    num_level = 3
    expected_cols = C * sum((i + 1) ** 2 for i in range(num_level))  # 4*(1+4+9)=56

    xf = jax.random.normal(key, (N, C, H, W), dtype=jnp.float32)
    xi = jax.random.randint(jax.random.PRNGKey(1), (N, C, H, W), -100, 100,
                            dtype=jnp.int32)

    # max is exact (including int32, no -inf sentinel needed); avg uses a
    # 0/1-weight MXU matmul at HIGH precision with an f32 post-scale.
    checks = [
        (xf, 'max_pool', 1e-6),
        (xi, 'max_pool', 0.0),
        (xf, 'avg_pool', 1e-4),
    ]
    for x, pool_type, tol in checks:
        out = jax.block_until_ready(
            spatial_pyramid_pooling_2d(x, num_level, pool_type))
        ref = _spp_reference(x, num_level, pool_type)
        assert out.shape == (N, expected_cols), (pool_type, out.shape)
        assert jnp.allclose(out.astype(jnp.float32), ref.astype(jnp.float32),
                            atol=tol, rtol=tol), pool_type

    print("KERNEL_OK")
</pallas_src>

<mosaic_0001>
module attributes {stable_mosaic.version = 11 : i64} {
  func.func @kernel(%arg0: i32, %arg1: i32, %arg2: memref<1x4x256xf32, #tpu.memory_space<vmem>>, %arg3: memref<1x4x14xf32, #tpu.memory_space<vmem>>) attributes {dimension_semantics = [#tpu.dimension_semantics<parallel>, #tpu.dimension_semantics<parallel>], iteration_bounds = array<i64: 2, 1>, scalar_prefetch = 0 : i64, scratch_operands = 0 : i64, tpu.core_type = #tpu.core_type<tc>, window_params = [{transform_indices = @transform_0, window_bounds = array<i64: 1, 4, 256>}, {transform_indices = @transform_1, window_bounds = array<i64: 1, 4, 14>}]} {
    %c0 = arith.constant 0 : index
    %c0_0 = arith.constant 0 : index
    %c0_1 = arith.constant 0 : index
    %0 = vector.load %arg2[%c0, %c0_0, %c0_1] : memref<1x4x256xf32, #tpu.memory_space<vmem>>, vector<1x4x16xf32>
    %1 = vector.shape_cast %0 : vector<1x4x16xf32> to vector<4x16xf32>
    %c0_2 = arith.constant 0 : index
    %c0_3 = arith.constant 0 : index
    %c16 = arith.constant 16 : index
    %2 = vector.load %arg2[%c0_2, %c0_3, %c16] : memref<1x4x256xf32, #tpu.memory_space<vmem>>, vector<1x4x16xf32>
    %3 = vector.shape_cast %2 : vector<1x4x16xf32> to vector<4x16xf32>
    %c0_4 = arith.constant 0 : index
    %c0_5 = arith.constant 0 : index
    %c32 = arith.constant 32 : index
    %4 = vector.load %arg2[%c0_4, %c0_5, %c32] : memref<1x4x256xf32, #tpu.memory_space<vmem>>, vector<1x4x16xf32>
    %5 = vector.shape_cast %4 : vector<1x4x16xf32> to vector<4x16xf32>
    %c0_6 = arith.constant 0 : index
    %c0_7 = arith.constant 0 : index
    %c48 = arith.constant 48 : index
    %6 = vector.load %arg2[%c0_6, %c0_7, %c48] : memref<1x4x256xf32, #tpu.memory_space<vmem>>, vector<1x4x16xf32>
    %7 = vector.shape_cast %6 : vector<1x4x16xf32> to vector<4x16xf32>
    %c0_8 = arith.constant 0 : index
    %c0_9 = arith.constant 0 : index
    %c64 = arith.constant 64 : index
    %8 = vector.load %arg2[%c0_8, %c0_9, %c64] : memref<1x4x256xf32, #tpu.memory_space<vmem>>, vector<1x4x16xf32>
    %9 = vector.shape_cast %8 : vector<1x4x16xf32> to vector<4x16xf32>
    %c0_10 = arith.constant 0 : index
    %c0_11 = arith.constant 0 : index
    %c80 = arith.constant 80 : index
    %10 = vector.load %arg2[%c0_10, %c0_11, %c80] : memref<1x4x256xf32, #tpu.memory_space<vmem>>, vector<1x4x16xf32>
    %11 = vector.shape_cast %10 : vector<1x4x16xf32> to vector<4x16xf32>
    %c0_12 = arith.constant 0 : index
    %c0_13 = arith.constant 0 : index
    %c96 = arith.constant 96 : index
    %12 = vector.load %arg2[%c0_12, %c0_13, %c96] : memref<1x4x256xf32, #tpu.memory_space<vmem>>, vector<1x4x16xf32>
    %13 = vector.shape_cast %12 : vector<1x4x16xf32> to vector<4x16xf32>
    %c0_14 = arith.constant 0 : index
    %c0_15 = arith.constant 0 : index
    %c112 = arith.constant 112 : index
    %14 = vector.load %arg2[%c0_14, %c0_15, %c112] : memref<1x4x256xf32, #tpu.memory_space<vmem>>, vector<1x4x16xf32>
    %15 = vector.shape_cast %14 : vector<1x4x16xf32> to vector<4x16xf32>
    %c0_16 = arith.constant 0 : index
    %c0_17 = arith.constant 0 : index
    %c128 = arith.constant 128 : index
    %16 = vector.load %arg2[%c0_16, %c0_17, %c128] : memref<1x4x256xf32, #tpu.memory_space<vmem>>, vector<1x4x16xf32>
    %17 = vector.shape_cast %16 : vector<1x4x16xf32> to vector<4x16xf32>
    %c0_18 = arith.constant 0 : index
    %c0_19 = arith.constant 0 : index
    %c144 = arith.constant 144 : index
    %18 = vector.load %arg2[%c0_18, %c0_19, %c144] : memref<1x4x256xf32, #tpu.memory_space<vmem>>, vector<1x4x16xf32>
    %19 = vector.shape_cast %18 : vector<1x4x16xf32> to vector<4x16xf32>
    %c0_20 = arith.constant 0 : index
    %c0_21 = arith.constant 0 : index
    %c160 = arith.constant 160 : index
    %20 = vector.load %arg2[%c0_20, %c0_21, %c160] : memref<1x4x256xf32, #tpu.memory_space<vmem>>, vector<1x4x16xf32>
    %21 = vector.shape_cast %20 : vector<1x4x16xf32> to vector<4x16xf32>
    %c0_22 = arith.constant 0 : index
    %c0_23 = arith.constant 0 : index
    %c176 = arith.constant 176 : index
    %22 = vector.load %arg2[%c0_22, %c0_23, %c176] : memref<1x4x256xf32, #tpu.memory_space<vmem>>, vector<1x4x16xf32>
    %23 = vector.shape_cast %22 : vector<1x4x16xf32> to vector<4x16xf32>
    %c0_24 = arith.constant 0 : index
    %c0_25 = arith.constant 0 : index
    %c192 = arith.constant 192 : index
    %24 = vector.load %arg2[%c0_24, %c0_25, %c192] : memref<1x4x256xf32, #tpu.memory_space<vmem>>, vector<1x4x16xf32>
    %25 = vector.shape_cast %24 : vector<1x4x16xf32> to vector<4x16xf32>
    %c0_26 = arith.constant 0 : index
    %c0_27 = arith.constant 0 : index
    %c208 = arith.constant 208 : index
    %26 = vector.load %arg2[%c0_26, %c0_27, %c208] : memref<1x4x256xf32, #tpu.memory_space<vmem>>, vector<1x4x16xf32>
    %27 = vector.shape_cast %26 : vector<1x4x16xf32> to vector<4x16xf32>
    %c0_28 = arith.constant 0 : index
    %c0_29 = arith.constant 0 : index
    %c224 = arith.constant 224 : index
    %28 = vector.load %arg2[%c0_28, %c0_29, %c224] : memref<1x4x256xf32, #tpu.memory_space<vmem>>, vector<1x4x16xf32>
    %29 = vector.shape_cast %28 : vector<1x4x16xf32> to vector<4x16xf32>
    %c0_30 = arith.constant 0 : index
    %c0_31 = arith.constant 0 : index
    %c240 = arith.constant 240 : index
    %30 = vector.load %arg2[%c0_30, %c0_31, %c240] : memref<1x4x256xf32, #tpu.memory_space<vmem>>, vector<1x4x16xf32>
    %31 = vector.shape_cast %30 : vector<1x4x16xf32> to vector<4x16xf32>
    %32 = arith.maximumf %1, %3 : vector<4x16xf32>
    %33 = arith.maximumf %5, %7 : vector<4x16xf32>
    %34 = arith.maximumf %9, %11 : vector<4x16xf32>
    %35 = arith.maximumf %13, %15 : vector<4x16xf32>
    %36 = arith.maximumf %17, %19 : vector<4x16xf32>
    %37 = arith.maximumf %21, %23 : vector<4x16xf32>
    %38 = arith.maximumf %25, %27 : vector<4x16xf32>
    %39 = arith.maximumf %29, %31 : vector<4x16xf32>
    %40 = arith.maximumf %32, %33 : vector<4x16xf32>
    %41 = arith.maximumf %34, %35 : vector<4x16xf32>
    %42 = arith.maximumf %36, %37 : vector<4x16xf32>
    %43 = arith.maximumf %38, %39 : vector<4x16xf32>
    %44 = arith.maximumf %40, %41 : vector<4x16xf32>
    %45 = arith.maximumf %42, %43 : vector<4x16xf32>
    %46 = arith.maximumf %44, %45 : vector<4x16xf32>
    %cst = arith.constant dense<0xFF800000> : vector<4xf32>
    %47 = vector.multi_reduction <maximumf>, %46, %cst [1] : vector<4x16xf32> to vector<4xf32>
    %48 = vector.shape_cast %47 : vector<4xf32> to vector<4x1xf32>
    %c0_32 = arith.constant 0 : index
    %c0_33 = arith.constant 0 : index
    %c0_34 = arith.constant 0 : index
    %49 = vector.load %arg2[%c0_32, %c0_33, %c0_34] : memref<1x4x256xf32, #tpu.memory_space<vmem>>, vector<1x4x16xf32>
    %50 = vector.shape_cast %49 : vector<1x4x16xf32> to vector<4x16xf32>
    %c0_35 = arith.constant 0 : index
    %c0_36 = arith.constant 0 : index
    %c16_37 = arith.constant 16 : index
    %51 = vector.load %arg2[%c0_35, %c0_36, %c16_37] : memref<1x4x256xf32, #tpu.memory_space<vmem>>, vector<1x4x16xf32>
    %52 = vector.shape_cast %51 : vector<1x4x16xf32> to vector<4x16xf32>
    %c0_38 = arith.constant 0 : index
    %c0_39 = arith.constant 0 : index
    %c32_40 = arith.constant 32 : index
    %53 = vector.load %arg2[%c0_38, %c0_39, %c32_40] : memref<1x4x256xf32, #tpu.memory_space<vmem>>, vector<1x4x16xf32>
    %54 = vector.shape_cast %53 : vector<1x4x16xf32> to vector<4x16xf32>
    %c0_41 = arith.constant 0 : index
    %c0_42 = arith.constant 0 : index
    %c48_43 = arith.constant 48 : index
    %55 = vector.load %arg2[%c0_41, %c0_42, %c48_43] : memref<1x4x256xf32, #tpu.memory_space<vmem>>, vector<1x4x16xf32>
    %56 = vector.shape_cast %55 : vector<1x4x16xf32> to vector<4x16xf32>
    %c0_44 = arith.constant 0 : index
    %c0_45 = arith.constant 0 : index
    %c64_46 = arith.constant 64 : index
    %57 = vector.load %arg2[%c0_44, %c0_45, %c64_46] : memref<1x4x256xf32, #tpu.memory_space<vmem>>, vector<1x4x16xf32>
    %58 = vector.shape_cast %57 : vector<1x4x16xf32> to vector<4x16xf32>
    %c0_47 = arith.constant 0 : index
    %c0_48 = arith.constant 0 : index
    %c80_49 = arith.constant 80 : index
    %59 = vector.load %arg2[%c0_47, %c0_48, %c80_49] : memref<1x4x256xf32, #tpu.memory_space<vmem>>, vector<1x4x16xf32>
    %60 = vector.shape_cast %59 : vector<1x4x16xf32> to vector<4x16xf32>
    %c0_50 = arith.constant 0 : index
    %c0_51 = arith.constant 0 : index
    %c96_52 = arith.constant 96 : index
    %61 = vector.load %arg2[%c0_50, %c0_51, %c96_52] : memref<1x4x256xf32, #tpu.memory_space<vmem>>, vector<1x4x16xf32>
    %62 = vector.shape_cast %61 : vector<1x4x16xf32> to vector<4x16xf32>
    %c0_53 = arith.constant 0 : index
    %c0_54 = arith.constant 0 : index
    %c112_55 = arith.constant 112 : index
    %63 = vector.load %arg2[%c0_53, %c0_54, %c112_55] : memref<1x4x256xf32, #tpu.memory_space<vmem>>, vector<1x4x16xf32>
    %64 = vector.shape_cast %63 : vector<1x4x16xf32> to vector<4x16xf32>
    %65 = arith.maximumf %50, %52 : vector<4x16xf32>
    %66 = arith.maximumf %54, %56 : vector<4x16xf32>
    %67 = arith.maximumf %58, %60 : vector<4x16xf32>
    %68 = arith.maximumf %62, %64 : vector<4x16xf32>
    %69 = arith.maximumf %65, %66 : vector<4x16xf32>
    %70 = arith.maximumf %67, %68 : vector<4x16xf32>
    %71 = arith.maximumf %69, %70 : vector<4x16xf32>
    %72 = vector.extract_strided_slice %71 {offsets = [0, 0], sizes = [4, 8], strides = [1, 1]} : vector<4x16xf32> to vector<4x8xf32>
    %cst_56 = arith.constant dense<0xFF800000> : vector<4xf32>
    %73 = vector.multi_reduction <maximumf>, %72, %cst_56 [1] : vector<4x8xf32> to vector<4xf32>
    %74 = vector.shape_cast %73 : vector<4xf32> to vector<4x1xf32>
    %75 = vector.extract_strided_slice %71 {offsets = [0, 8], sizes = [4, 8], strides = [1, 1]} : vector<4x16xf32> to vector<4x8xf32>
    %cst_57 = arith.constant dense<0xFF800000> : vector<4xf32>
    %76 = vector.multi_reduction <maximumf>, %75, %cst_57 [1] : vector<4x8xf32> to vector<4xf32>
    %77 = vector.shape_cast %76 : vector<4xf32> to vector<4x1xf32>
    %c0_58 = arith.constant 0 : index
    %c0_59 = arith.constant 0 : index
    %c128_60 = arith.constant 128 : index
    %78 = vector.load %arg2[%c0_58, %c0_59, %c128_60] : memref<1x4x256xf32, #tpu.memory_space<vmem>>, vector<1x4x16xf32>
    %79 = vector.shape_cast %78 : vector<1x4x16xf32> to vector<4x16xf32>
    %c0_61 = arith.constant 0 : index
    %c0_62 = arith.constant 0 : index
    %c144_63 = arith.constant 144 : index
    %80 = vector.load %arg2[%c0_61, %c0_62, %c144_63] : memref<1x4x256xf32, #tpu.memory_space<vmem>>, vector<1x4x16xf32>
    %81 = vector.shape_cast %80 : vector<1x4x16xf32> to vector<4x16xf32>
    %c0_64 = arith.constant 0 : index
    %c0_65 = arith.constant 0 : index
    %c160_66 = arith.constant 160 : index
    %82 = vector.load %arg2[%c0_64, %c0_65, %c160_66] : memref<1x4x256xf32, #tpu.memory_space<vmem>>, vector<1x4x16xf32>
    %83 = vector.shape_cast %82 : vector<1x4x16xf32> to vector<4x16xf32>
    %c0_67 = arith.constant 0 : index
    %c0_68 = arith.constant 0 : index
    %c176_69 = arith.constant 176 : index
    %84 = vector.load %arg2[%c0_67, %c0_68, %c176_69] : memref<1x4x256xf32, #tpu.memory_space<vmem>>, vector<1x4x16xf32>
    %85 = vector.shape_cast %84 : vector<1x4x16xf32> to vector<4x16xf32>
    %c0_70 = arith.constant 0 : index
    %c0_71 = arith.constant 0 : index
    %c192_72 = arith.constant 192 : index
    %86 = vector.load %arg2[%c0_70, %c0_71, %c192_72] : memref<1x4x256xf32, #tpu.memory_space<vmem>>, vector<1x4x16xf32>
    %87 = vector.shape_cast %86 : vector<1x4x16xf32> to vector<4x16xf32>
    %c0_73 = arith.constant 0 : index
    %c0_74 = arith.constant 0 : index
    %c208_75 = arith.constant 208 : index
    %88 = vector.load %arg2[%c0_73, %c0_74, %c208_75] : memref<1x4x256xf32, #tpu.memory_space<vmem>>, vector<1x4x16xf32>
    %89 = vector.shape_cast %88 : vector<1x4x16xf32> to vector<4x16xf32>
    %c0_76 = arith.constant 0 : index
    %c0_77 = arith.constant 0 : index
    %c224_78 = arith.constant 224 : index
    %90 = vector.load %arg2[%c0_76, %c0_77, %c224_78] : memref<1x4x256xf32, #tpu.memory_space<vmem>>, vector<1x4x16xf32>
    %91 = vector.shape_cast %90 : vector<1x4x16xf32> to vector<4x16xf32>
    %c0_79 = arith.constant 0 : index
    %c0_80 = arith.constant 0 : index
    %c240_81 = arith.constant 240 : index
    %92 = vector.load %arg2[%c0_79, %c0_80, %c240_81] : memref<1x4x256xf32, #tpu.memory_space<vmem>>, vector<1x4x16xf32>
    %93 = vector.shape_cast %92 : vector<1x4x16xf32> to vector<4x16xf32>
    %94 = arith.maximumf %79, %81 : vector<4x16xf32>
    %95 = arith.maximumf %83, %85 : vector<4x16xf32>
    %96 = arith.maximumf %87, %89 : vector<4x16xf32>
    %97 = arith.maximumf %91, %93 : vector<4x16xf32>
    %98 = arith.maximumf %94, %95 : vector<4x16xf32>
    %99 = arith.maximumf %96, %97 : vector<4x16xf32>
    %100 = arith.maximumf %98, %99 : vector<4x16xf32>
    %101 = vector.extract_strided_slice %100 {offsets = [0, 0], sizes = [4, 8], strides = [1, 1]} : vector<4x16xf32> to vector<4x8xf32>
    %cst_82 = arith.constant dense<0xFF800000> : vector<4xf32>
    %102 = vector.multi_reduction <maximumf>, %101, %cst_82 [1] : vector<4x8xf32> to vector<4xf32>
    %103 = vector.shape_cast %102 : vector<4xf32> to vector<4x1xf32>
    %104 = vector.extract_strided_slice %100 {offsets = [0, 8], sizes = [4, 8], strides = [1, 1]} : vector<4x16xf32> to vector<4x8xf32>
    %cst_83 = arith.constant dense<0xFF800000> : vector<4xf32>
    %105 = vector.multi_reduction <maximumf>, %104, %cst_83 [1] : vector<4x8xf32> to vector<4xf32>
    %106 = vector.shape_cast %105 : vector<4xf32> to vector<4x1xf32>
    %c0_84 = arith.constant 0 : index
    %c0_85 = arith.constant 0 : index
    %c0_86 = arith.constant 0 : index
    %107 = vector.load %arg2[%c0_84, %c0_85, %c0_86] : memref<1x4x256xf32, #tpu.memory_space<vmem>>, vector<1x4x16xf32>
    %108 = vector.shape_cast %107 : vector<1x4x16xf32> to vector<4x16xf32>
    %c0_87 = arith.constant 0 : index
    %c0_88 = arith.constant 0 : index
    %c16_89 = arith.constant 16 : index
    %109 = vector.load %arg2[%c0_87, %c0_88, %c16_89] : memref<1x4x256xf32, #tpu.memory_space<vmem>>, vector<1x4x16xf32>
    %110 = vector.shape_cast %109 : vector<1x4x16xf32> to vector<4x16xf32>
    %c0_90 = arith.constant 0 : index
    %c0_91 = arith.constant 0 : index
    %c32_92 = arith.constant 32 : index
    %111 = vector.load %arg2[%c0_90, %c0_91, %c32_92] : memref<1x4x256xf32, #tpu.memory_space<vmem>>, vector<1x4x16xf32>
    %112 = vector.shape_cast %111 : vector<1x4x16xf32> to vector<4x16xf32>
    %c0_93 = arith.constant 0 : index
    %c0_94 = arith.constant 0 : index
    %c48_95 = arith.constant 48 : index
    %113 = vector.load %arg2[%c0_93, %c0_94, %c48_95] : memref<1x4x256xf32, #tpu.memory_space<vmem>>, vector<1x4x16xf32>
    %114 = vector.shape_cast %113 : vector<1x4x16xf32> to vector<4x16xf32>
    %c0_96 = arith.constant 0 : index
    %c0_97 = arith.constant 0 : index
    %c64_98 = arith.constant 64 : index
    %115 = vector.load %arg2[%c0_96, %c0_97, %c64_98] : memref<1x4x256xf32, #tpu.memory_space<vmem>>, vector<1x4x16xf32>
    %116 = vector.shape_cast %115 : vector<1x4x16xf32> to vector<4x16xf32>
    %117 = arith.maximumf %108, %110 : vector<4x16xf32>
    %118 = arith.maximumf %112, %114 : vector<4x16xf32>
    %119 = arith.maximumf %117, %118 : vector<4x16xf32>
    %120 = arith.maximumf %119, %116 : vector<4x16xf32>
    %121 = vector.extract_strided_slice %120 {offsets = [0, 0], sizes = [4, 5], strides = [1, 1]} : vector<4x16xf32> to vector<4x5xf32>
    %cst_99 = arith.constant dense<0xFF800000> : vector<4xf32>
    %122 = vector.multi_reduction <maximumf>, %121, %cst_99 [1] : vector<4x5xf32> to vector<4xf32>
    %123 = vector.shape_cast %122 : vector<4xf32> to vector<4x1xf32>
    %124 = vector.extract_strided_slice %120 {offsets = [0, 5], sizes = [4, 6], strides = [1, 1]} : vector<4x16xf32> to vector<4x6xf32>
    %cst_100 = arith.constant dense<0xFF800000> : vector<4xf32>
    %125 = vector.multi_reduction <maximumf>, %124, %cst_100 [1] : vector<4x6xf32> to vector<4xf32>
    %126 = vector.shape_cast %125 : vector<4xf32> to vector<4x1xf32>
    %127 = vector.extract_strided_slice %120 {offsets = [0, 11], sizes = [4, 5], strides = [1, 1]} : vector<4x16xf32> to vector<4x5xf32>
    %cst_101 = arith.constant dense<0xFF800000> : vector<4xf32>
    %128 = vector.multi_reduction <maximumf>, %127, %cst_101 [1] : vector<4x5xf32> to vector<4xf32>
    %129 = vector.shape_cast %128 : vector<4xf32> to vector<4x1xf32>
    %c0_102 = arith.constant 0 : index
    %c0_103 = arith.constant 0 : index
    %c80_104 = arith.constant 80 : index
    %130 = vector.load %arg2[%c0_102, %c0_103, %c80_104] : memref<1x4x256xf32, #tpu.memory_space<vmem>>, vector<1x4x16xf32>
    %131 = vector.shape_cast %130 : vector<1x4x16xf32> to vector<4x16xf32>
    %c0_105 = arith.constant 0 : index
    %c0_106 = arith.constant 0 : index
    %c96_107 = arith.constant 96 : index
    %132 = vector.load %arg2[%c0_105, %c0_106, %c96_107] : memref<1x4x256xf32, #tpu.memory_space<vmem>>, vector<1x4x16xf32>
    %133 = vector.shape_cast %132 : vector<1x4x16xf32> to vector<4x16xf32>
    %c0_108 = arith.constant 0 : index
    %c0_109 = arith.constant 0 : index
    %c112_110 = arith.constant 112 : index
    %134 = vector.load %arg2[%c0_108, %c0_109, %c112_110] : memref<1x4x256xf32, #tpu.memory_space<vmem>>, vector<1x4x16xf32>
    %135 = vector.shape_cast %134 : vector<1x4x16xf32> to vector<4x16xf32>
    %c0_111 = arith.constant 0 : index
    %c0_112 = arith.constant 0 : index
    %c128_113 = arith.constant 128 : index
    %136 = vector.load %arg2[%c0_111, %c0_112, %c128_113] : memref<1x4x256xf32, #tpu.memory_space<vmem>>, vector<1x4x16xf32>
    %137 = vector.shape_cast %136 : vector<1x4x16xf32> to vector<4x16xf32>
    %c0_114 = arith.constant 0 : index
    %c0_115 = arith.constant 0 : index
    %c144_116 = arith.constant 144 : index
    %138 = vector.load %arg2[%c0_114, %c0_115, %c144_116] : memref<1x4x256xf32, #tpu.memory_space<vmem>>, vector<1x4x16xf32>
    %139 = vector.shape_cast %138 : vector<1x4x16xf32> to vector<4x16xf32>
    %c0_117 = arith.constant 0 : index
    %c0_118 = arith.constant 0 : index
    %c160_119 = arith.constant 160 : index
    %140 = vector.load %arg2[%c0_117, %c0_118, %c160_119] : memref<1x4x256xf32, #tpu.memory_space<vmem>>, vector<1x4x16xf32>
    %141 = vector.shape_cast %140 : vector<1x4x16xf32> to vector<4x16xf32>
    %142 = arith.maximumf %131, %133 : vector<4x16xf32>
    %143 = arith.maximumf %135, %137 : vector<4x16xf32>
    %144 = arith.maximumf %139, %141 : vector<4x16xf32>
    %145 = arith.maximumf %142, %143 : vector<4x16xf32>
    %146 = arith.maximumf %145, %144 : vector<4x16xf32>
    %147 = vector.extract_strided_slice %146 {offsets = [0, 0], sizes = [4, 5], strides = [1, 1]} : vector<4x16xf32> to vector<4x5xf32>
    %cst_120 = arith.constant dense<0xFF800000> : vector<4xf32>
    %148 = vector.multi_reduction <maximumf>, %147, %cst_120 [1] : vector<4x5xf32> to vector<4xf32>
    %149 = vector.shape_cast %148 : vector<4xf32> to vector<4x1xf32>
    %150 = vector.extract_strided_slice %146 {offsets = [0, 5], sizes = [4, 6], strides = [1, 1]} : vector<4x16xf32> to vector<4x6xf32>
    %cst_121 = arith.constant dense<0xFF800000> : vector<4xf32>
    %151 = vector.multi_reduction <maximumf>, %150, %cst_121 [1] : vector<4x6xf32> to vector<4xf32>
    %152 = vector.shape_cast %151 : vector<4xf32> to vector<4x1xf32>
    %153 = vector.extract_strided_slice %146 {offsets = [0, 11], sizes = [4, 5], strides = [1, 1]} : vector<4x16xf32> to vector<4x5xf32>
    %cst_122 = arith.constant dense<0xFF800000> : vector<4xf32>
    %154 = vector.multi_reduction <maximumf>, %153, %cst_122 [1] : vector<4x5xf32> to vector<4xf32>
    %155 = vector.shape_cast %154 : vector<4xf32> to vector<4x1xf32>
    %c0_123 = arith.constant 0 : index
    %c0_124 = arith.constant 0 : index
    %c176_125 = arith.constant 176 : index
    %156 = vector.load %arg2[%c0_123, %c0_124, %c176_125] : memref<1x4x256xf32, #tpu.memory_space<vmem>>, vector<1x4x16xf32>
    %157 = vector.shape_cast %156 : vector<1x4x16xf32> to vector<4x16xf32>
    %c0_126 = arith.constant 0 : index
    %c0_127 = arith.constant 0 : index
    %c192_128 = arith.constant 192 : index
    %158 = vector.load %arg2[%c0_126, %c0_127, %c192_128] : memref<1x4x256xf32, #tpu.memory_space<vmem>>, vector<1x4x16xf32>
    %159 = vector.shape_cast %158 : vector<1x4x16xf32> to vector<4x16xf32>
    %c0_129 = arith.constant 0 : index
    %c0_130 = arith.constant 0 : index
    %c208_131 = arith.constant 208 : index
    %160 = vector.load %arg2[%c0_129, %c0_130, %c208_131] : memref<1x4x256xf32, #tpu.memory_space<vmem>>, vector<1x4x16xf32>
    %161 = vector.shape_cast %160 : vector<1x4x16xf32> to vector<4x16xf32>
    %c0_132 = arith.constant 0 : index
    %c0_133 = arith.constant 0 : index
    %c224_134 = arith.constant 224 : index
    %162 = vector.load %arg2[%c0_132, %c0_133, %c224_134] : memref<1x4x256xf32, #tpu.memory_space<vmem>>, vector<1x4x16xf32>
    %163 = vector.shape_cast %162 : vector<1x4x16xf32> to vector<4x16xf32>
    %c0_135 = arith.constant 0 : index
    %c0_136 = arith.constant 0 : index
    %c240_137 = arith.constant 240 : index
    %164 = vector.load %arg2[%c0_135, %c0_136, %c240_137] : memref<1x4x256xf32, #tpu.memory_space<vmem>>, vector<1x4x16xf32>
    %165 = vector.shape_cast %164 : vector<1x4x16xf32> to vector<4x16xf32>
    %166 = arith.maximumf %157, %159 : vector<4x16xf32>
    %167 = arith.maximumf %161, %163 : vector<4x16xf32>
    %168 = arith.maximumf %166, %167 : vector<4x16xf32>
    %169 = arith.maximumf %168, %165 : vector<4x16xf32>
    %170 = vector.extract_strided_slice %169 {offsets = [0, 0], sizes = [4, 5], strides = [1, 1]} : vector<4x16xf32> to vector<4x5xf32>
    %cst_138 = arith.constant dense<0xFF800000> : vector<4xf32>
    %171 = vector.multi_reduction <maximumf>, %170, %cst_138 [1] : vector<4x5xf32> to vector<4xf32>
    %172 = vector.shape_cast %171 : vector<4xf32> to vector<4x1xf32>
    %173 = vector.extract_strided_slice %169 {offsets = [0, 5], sizes = [4, 6], strides = [1, 1]} : vector<4x16xf32> to vector<4x6xf32>
    %cst_139 = arith.constant dense<0xFF800000> : vector<4xf32>
    %174 = vector.multi_reduction <maximumf>, %173, %cst_139 [1] : vector<4x6xf32> to vector<4xf32>
    %175 = vector.shape_cast %174 : vector<4xf32> to vector<4x1xf32>
    %176 = vector.extract_strided_slice %169 {offsets = [0, 11], sizes = [4, 5], strides = [1, 1]} : vector<4x16xf32> to vector<4x5xf32>
    %cst_140 = arith.constant dense<0xFF800000> : vector<4xf32>
    %177 = vector.multi_reduction <maximumf>, %176, %cst_140 [1] : vector<4x5xf32> to vector<4xf32>
    %178 = vector.shape_cast %177 : vector<4xf32> to vector<4x1xf32>
    %179 = tpu.concatenate %48, %74, %77, %103, %106, %123, %126, %129, %149, %152, %155, %172, %175, %178 in 1 : vector<4x1xf32>, vector<4x1xf32>, vector<4x1xf32>, vector<4x1xf32>, vector<4x1xf32>, vector<4x1xf32>, vector<4x1xf32>, vector<4x1xf32>, vector<4x1xf32>, vector<4x1xf32>, vector<4x1xf32>, vector<4x1xf32>, vector<4x1xf32>, vector<4x1xf32> -> vector<4x14xf32>
    %c0_141 = arith.constant 0 : index
    %c0_142 = arith.constant 0 : index
    %c0_143 = arith.constant 0 : index
    %180 = vector.load %arg3[%c0_141, %c0_142, %c0_143] : memref<1x4x14xf32, #tpu.memory_space<vmem>>, vector<1x4x14xf32>
    %181 = vector.shape_cast %180 : vector<1x4x14xf32> to vector<4x14xf32>
    %182 = vector.shape_cast %179 : vector<4x14xf32> to vector<1x4x14xf32>
    tpu.vector_store %arg3[%c0_141, %c0_142, %c0_143], %182 {strides = array<i32>} : memref<1x4x14xf32, #tpu.memory_space<vmem>>, vector<1x4x14xf32>,
    return
  }
  func.func @transform_0(%arg0: i32, %arg1: i32) -> (i32, i32, i32) {
    %c0_i32 = arith.constant 0 : i32
    %c0_i32_0 = arith.constant 0 : i32
    return %arg0, %arg1, %c0_i32 : i32, i32, i32
  }
  func.func @transform_1(%arg0: i32, %arg1: i32) -> (i32, i32, i32) {
    %c0_i32 = arith.constant 0 : i32
    %c0_i32_0 = arith.constant 0 : i32
    return %arg0, %arg1, %c0_i32 : i32, i32, i32
  }
}

</mosaic_0001>

<llo_original>
// kernel: tpu_custom_call.1
$region0: #{tpu_custom_call.1}
  #allocation0 [shape = 'u32[]', space=smem, size = 0x4, offset = 0x4, fixed_abs, tag = 'smem constant byte address 0x4 - core index']
  #allocation1 [shape = 'u32[72,128]{1,0:T(1,128)}', space=vmem, size = 0x9000, scoped, tag = 'internal scratch']
  %s0 = inlined_call_operand.hbm [shape: f32[2,4,256], index: 0, kind: input, shape index: {}]
  %s1 = inlined_call_operand.hbm [shape: f32[2,4,14], index: 1, kind: output, shape index: {}]
  %s2 = sld [smem:[#allocation0]]
  $region41: #{tpu_custom_call.1} parent=0
    _
  %s4 = ssub.s32 1, %s2
  %s5 = scalar_select 0, %s4, %s2
  $region1: #{tpu_custom_call.1} parent=0
    #allocation2 [shape = 'u8[8192]{0}', space=vmem, size = 0x2000, scoped, tag = 'input window, operand 0']
    #allocation3 [shape = 's32[2]{0}', space=sflag, size = 0x8, scoped, tag = 'scoped memory for tpu_custom_call.1']
    #allocation4 [shape = 's32[2]{0}', space=sflag, size = 0x8, scoped, tag = 'scoped memory for tpu_custom_call.1']
    #allocation5 [shape = 'u8[4096]{0}', space=vmem, size = 0x1000, scoped, tag = 'output window, operand 0']
    %6 = vsyncpa [#allocation3], 0
    %s7 = scalar_lea.sflag [#allocation3], 1
    %8 = vsyncpa %s7, 0
    %9 = vsyncpa [#allocation4], 0
    %s10 = scalar_lea.sflag [#allocation4], 1
    %11 = vsyncpa %s10, 0
    loop: start=0, step=1, limit=4
    $region2: #{tpu_custom_call.1} parent=1 // loop_pre_header
      _
    $region3: #{tpu_custom_call.1} parent=1 // loop_header
      %s13 = sphi 0, %s17
      %p14 = scmp.ge.s32.totalorder %s13, 4
      %s20 = sphi 0, %s32
      %s21 = sphi 0, %s28
      %s22 = sphi 0, %s20
      %s23 = sphi 0, %s21
      %s24 = sphi 0, %s22
      %s25 = sphi 0, %s23
      %s37 = sphi 0, %s39
      %s40 = sphi 0, %s37
      %s41 = sphi 0, %s40
      %s57 = sphi 0, %s41
      %s65 = sphi 0, %s67
      %s68 = sphi 0, %s65
      %s69 = sphi 0, %s68
      %s85 = sphi 0, %s69
    $region4: #{tpu_custom_call.1} parent=1 // loop_header_branch
      %16 = sbr.rel (%p14) target = $region8
    $region5: #{tpu_custom_call.1} parent=1 // loop_body
      %s18 = ssub.s32 %s13, 1
      %s19 = ssub.s32 %s13, 2
      %s26 = sadd.s32 1, %s21
      %p27 = scmp.ge.s32.totalorder %s26, 1
      %s28 = scalar_select %p27, 0, %s26
      %s29 = sadd.s32 1, %s20
      %s30 = scalar_select %p27, %s29, %s20
      %p31 = scmp.ge.s32.totalorder %s30, 2
      %s32 = scalar_select %p31, 0, %s30
      %s33 = ssub.s32 %s20, %s32
      %s34 = ssub.s32 %s21, %s28
      %s35 = sor.u32 %s33, %s34
      %p36 = scmp.eq.s32.totalorder %s35, 0
      %s38 = sadd.s32 %s37, 1
      %s39 = scalar_select %p36, %s37, %s38
      %p42 = pneg %p36
      %p43 = scmp.eq.s32.totalorder %s13, 1
      %p44 = por %p42, %p43
      %p45 = scmp.ne.s32.totalorder %s37, %s40
      %p46 = scmp.eq.s32.totalorder %s13, 0
      %p47 = por %p45, %p46
      %p48 = scmp.ne.s32.totalorder %s37, %s40
      %p49 = scmp.eq.s32.totalorder %s18, 1
      %p50 = por %p48, %p49
      %p51 = scmp.ne.s32.totalorder %s40, %s41
      %p52 = scmp.eq.s32.totalorder %s18, 0
      %p53 = por %p51, %p52
      %p54 = scmp.ne.s32.totalorder %s40, %s41
      %p55 = scmp.eq.s32.totalorder %s19, 1
      %p56 = por %p54, %p55
      %p58 = scmp.ne.s32.totalorder %s41, %s57
      %p59 = scmp.eq.s32.totalorder %s19, 0
      %p60 = por %p58, %p59
      %s61 = ssub.s32 %s20, %s32
      %s62 = ssub.s32 %s21, %s28
      %s63 = sor.u32 %s61, %s62
      %p64 = scmp.eq.s32.totalorder %s63, 0
      %s66 = sadd.s32 %s65, 1
      %s67 = scalar_select %p64, %s65, %s66
      %p70 = pneg %p64
      %p71 = scmp.eq.s32.totalorder %s13, 1
      %p72 = por %p70, %p71
      %p73 = scmp.ne.s32.totalorder %s65, %s68
      %p74 = scmp.eq.s32.totalorder %s13, 0
      %p75 = por %p73, %p74
      %p76 = scmp.ne.s32.totalorder %s65, %s68
      %p77 = scmp.eq.s32.totalorder %s18, 1
      %p78 = por %p76, %p77
      %p79 = scmp.ne.s32.totalorder %s68, %s69
      %p80 = scmp.eq.s32.totalorder %s18, 0
      %p81 = por %p79, %p80
      %p82 = scmp.ne.s32.totalorder %s68, %s69
      %p83 = scmp.eq.s32.totalorder %s19, 1
      %p84 = por %p82, %p83
      %p86 = scmp.ne.s32.totalorder %s69, %s85
      %p87 = scmp.eq.s32.totalorder %s19, 0
      %p88 = por %p86, %p87
      %p89 = scmp.le.s32.totalorder 1, %s13
      %p90 = scmp.lt.s32.totalorder %s13, 3
      %p91 = pnand %p89, %p90
      %p92 = pneg %p91
      // Predicated region
      $region9: #{tpu_custom_call.1} parent=5 // pred_check
        _
      $region10: #{tpu_custom_call.1} parent=5 // pred_check_branch
        %94 = sbr.rel (%p91) target = $region12
      $region11: #{tpu_custom_call.1} parent=5 // pred_region
        %s95 = ssub.s32 %s13, 1
      $region12: #{tpu_custom_call.1} parent=5 // pred_fallthru
        _
      %p96 = scmp.lt.s32.totalorder %s13, 2
      // Predicated region
      $region13: #{tpu_custom_call.1} parent=5 // pred_check
        %p97 = pneg %p96
      $region14: #{tpu_custom_call.1} parent=5 // pred_check_branch
        %99 = sbr.rel (%p97) target = $region16
      $region15: #{tpu_custom_call.1} parent=5 // pred_region
        // Predicated region
        $region17: #{tpu_custom_call.1} parent=15 // pred_check
          %p100 = pneg %p47
        $region18: #{tpu_custom_call.1} parent=15 // pred_check_branch
          %102 = sbr.rel (%p100) target = $region20
        $region19: #{tpu_custom_call.1} parent=15 // pred_region
          %s103 = sand.u32 %s37, 1
          %s104 = scalar_lea.sflag [#allocation3], %s103
          %s105 = sand.u32 %s37, 1
          %s106 = smul.addr %s105, 8
          %s107 = scalar_lea.vmem [#allocation2], %s106
          %109 = vsyncadd %s104, 0
          %s110 = smul.addr %s21, 2
          %s111 = smul.addr %s20, 2
          %s112 = sadd.s32 %s110, %s111
          %s113 = smul.addr %s112, 4
          %s114 = scalar_lea.hbm %s0, %s113
          %s116 = sshll.u32 %s114, 4
          %s117 = int_to_ptr.hbm [resolvable:$true] %s116
          %s118 = sshll.u32 %s107, 4
          %s119 = int_to_ptr.vmem [resolvable:$true] %s118
          %121 = dma.hbm_to_vmem [thread:$0]  %s117, 128, %s119, %s104
        $region20: #{tpu_custom_call.1} parent=15 // pred_fallthru
          _
      $region16: #{tpu_custom_call.1} parent=5 // pred_fallthru
        _
      %p122 = scmp.le.s32.totalorder 1, %s13
      %p123 = scmp.lt.s32.totalorder %s13, 3
      %p124 = pnand %p122, %p123
      %p125 = pneg %p124
      // Predicated region
      $region21: #{tpu_custom_call.1} parent=5 // pred_check
        _
      $region22: #{tpu_custom_call.1} parent=5 // pred_check_branch
        %127 = sbr.rel (%p124) target = $region24
      $region23: #{tpu_custom_call.1} parent=5 // pred_region
        %s128 = ssub.s32 %s13, 1
        %s129 = sand.u32 %s40, 1
        %s130 = scalar_lea.sflag [#allocation3], %s129
        %s131 = sand.u32 %s40, 1
        %s132 = smul.addr %s131, 8
        %s133 = scalar_lea.vmem [#allocation2], %s132
        // Predicated region
        $region25: #{tpu_custom_call.1} parent=23 // pred_check
          %p134 = pneg %p53
        $region26: #{tpu_custom_call.1} parent=23 // pred_check_branch
          %136 = sbr.rel (%p134) target = $region28
        $region27: #{tpu_custom_call.1} parent=23 // pred_region
          %138 = dma.done %s130, 128
        $region28: #{tpu_custom_call.1} parent=23 // pred_fallthru
          _
        %s139 = sand.u32 %s40, 1
        %s140 = scalar_lea.sflag [#allocation3], %s139
        %s141 = sand.u32 %s40, 1
        %s142 = smul.addr %s141, 8
        %s143 = scalar_lea.vmem [#allocation2], %s142
        %p144 = pneg %p53
        %p145 = pneg %p50
        %p146 = pneg %p81
        %p147 = pneg %p78
        %s148 = sand.u32 %s68, 1
        %s149 = scalar_lea.sflag [#allocation4], %s148
        %s150 = sand.u32 %s68, 1
        %s151 = smul.addr %s150, 4
        %s152 = scalar_lea.vmem [#allocation5], %s151
        %v153 = vld [vmem:[%s133] sm:$0xf]
        %v154 = vld [vmem:[%s133 + $0x4] sm:$0xf]
        %156 = vrot.lane.b32.xlu0 %v153, 112
        %v157 = vpop.permute.xlu0 %156
        %v159 = vmax.f32 %v153, %v157
        %161 = vrot.lane.b32.xlu0 %v154, 112
        %v162 = vpop.permute.xlu0 %161
        %v164 = vmax.f32 %v154, %v162
        %166 = vrot.lane.b32.xlu0 %v159, 96
        %v167 = vpop.permute.xlu0 %166
        %v169 = vmax.f32 %v159, %v167
        %171 = vrot.lane.b32.xlu0 %v164, 96
        %v172 = vpop.permute.xlu0 %171
        %v174 = vmax.f32 %v164, %v172
        %176 = vrot.lane.b32.xlu0 %v169, 64
        %v177 = vpop.permute.xlu0 %176
        %v179 = vmax.f32 %v169, %v177
        %181 = vrot.lane.b32.xlu0 %v174, 64
        %v182 = vpop.permute.xlu0 %181
        %v184 = vmax.f32 %v174, %v182
        %v185 = vmax.f32 %v179, %v184
        %vm186 = vcmask 125952
        %v187 = vsel %vm186, %v185, -inf
        %188 = vmax.xlane.f32.xlu0 %v187
        %v189 = vpop.xlane.xlu0 %188
        %vm190 = vcmask 60416
        %v191 = vsel %vm190, %v179, -inf
        %192 = vmax.xlane.f32.xlu0 %v191
        %v193 = vpop.xlane.xlu0 %192
        %vm194 = vcmask 126016
        %v195 = vsel %vm194, %v179, -inf
        %196 = vmax.xlane.f32.xlu0 %v195
        %v197 = vpop.xlane.xlu0 %196
        %v198 = vsel %vm190, %v184, -inf
        %199 = vmax.xlane.f32.xlu0 %v198
        %v200 = vpop.xlane.xlu0 %199
        %v201 = vsel %vm194, %v184, -inf
        %202 = vmax.xlane.f32.xlu0 %v201
        %v203 = vpop.xlane.xlu0 %202
        %204 = vrot.lane.b32.xlu0 %v153, 64
        %v205 = vpop.permute.xlu0 %204
        %v207 = vmax.f32 %v169, %v205
        %vm208 = vcmask 35840
        %v209 = vsel %vm208, %v207, -inf
        %210 = vmax.xlane.f32.xlu0 %v209
        %v211 = vpop.xlane.xlu0 %210
        %vm212 = vcmask 85032
        %v213 = vsel %vm212, %v207, -inf
        %214 = vmax.xlane.f32.xlu0 %v213
        %v215 = vpop.xlane.xlu0 %214
        %vm216 = vcmask 126040
        %v217 = vsel %vm216, %v207, -inf
        %218 = vmax.xlane.f32.xlu0 %v217
        %v219 = vpop.xlane.xlu0 %218
        %v220 = vmax.f32 %v153, %v162
        %222 = vrot.lane.b32.xlu0 %v220, 96
        %v223 = vpop.permute.xlu0 %222
        %v225 = vmax.f32 %v159, %v223
        %226 = vrot.lane.b32.xlu0 %v164, 64
        %v227 = vpop.permute.xlu0 %226
        %v229 = vmax.f32 %v225, %v227
        %vm230 = vcmask 691840
        %v231 = vsel %vm230, %v229, -inf
        %232 = vmax.xlane.f32.xlu0 %v231
        %v233 = vpop.xlane.xlu0 %232
        %vm234 = vcmask 741032
        %v235 = vsel %vm234, %v229, -inf
        %236 = vmax.xlane.f32.xlu0 %v235
        %v237 = vpop.xlane.xlu0 %236
        %vm238 = vcmask 782040
        %v239 = vsel %vm238, %v229, -inf
        %240 = vmax.xlane.f32.xlu0 %v239
        %v241 = vpop.xlane.xlu0 %240
        %242 = vrot.lane.b32.xlu0 %v154, 64
        %v243 = vpop.permute.xlu0 %242
        %v245 = vmax.f32 %v174, %v243
        %vm246 = vcmask 429440
        %v247 = vsel %vm246, %v245, -inf
        %248 = vmax.xlane.f32.xlu0 %v247
        %v249 = vpop.xlane.xlu0 %248
        %vm250 = vcmask 478632
        %v251 = vsel %vm250, %v245, -inf
        %252 = vmax.xlane.f32.xlu0 %v251
        %v253 = vpop.xlane.xlu0 %252
        %vm254 = vcmask 519640
        %v255 = vsel %vm254, %v245, -inf
        %256 = vmax.xlane.f32.xlu0 %v255
        %v257 = vpop.xlane.xlu0 %256
        %vm258 = vcmask 7168
        %v259 = vsel %vm258, %v189, %v193
        %vm260 = vcmask 15360
        %v261 = vsel %vm260, %v259, %v197
        %vm262 = vcmask 23552
        %v263 = vsel %vm262, %v261, %v200
        %vm264 = vcmask 31744
        %v265 = vsel %vm264, %v263, %v203
        %vm266 = vcmask 39936
        %v267 = vsel %vm266, %v265, %v211
        %vm268 = vcmask 48128
        %v269 = vsel %vm268, %v267, %v215
        %vm270 = vcmask 56320
        %v271 = vsel %vm270, %v269, %v219
        %vm272 = vcmask 64512
        %v273 = vsel %vm272, %v271, %v233
        %vm274 = vcmask 72704
        %v275 = vsel %vm274, %v273, %v237
        %vm276 = vcmask 80896
        %v277 = vsel %vm276, %v275, %v241
        %vm278 = vcmask 89088
        %v279 = vsel %vm278, %v277, %v249
        %vm280 = vcmask 97280
        %v281 = vsel %vm280, %v279, %v253
        %vm282 = vcmask 105472
        %v283 = vsel %vm282, %v281, %v257
        %vm284 = vcmask 109568
        %285 = vst.msk [vmem:[%s152] sm:$0xf] %vm284, %v283
        %s286 = sand.u32 %s68, 1
        %s287 = scalar_lea.sflag [#allocation4], %s286
        %s288 = sand.u32 %s68, 1
        %s289 = smul.addr %s288, 4
        %s290 = scalar_lea.vmem [#allocation5], %s289
        // Predicated region
        $region29: #{tpu_custom_call.1} parent=23 // pred_check
          %p291 = pneg %p78
        $region30: #{tpu_custom_call.1} parent=23 // pred_check_branch
          %293 = sbr.rel (%p291) target = $region32
        $region31: #{tpu_custom_call.1} parent=23 // pred_region
          %295 = vsyncadd %s287, 0
          %s296 = sadd.s32 %s23, %s22
          %s297 = smul.addr %s296, 4
          %s298 = scalar_lea.hbm %s1, %s297
          %s300 = sshll.u32 %s290, 4
          %s301 = int_to_ptr.vmem [resolvable:$true] %s300
          %s302 = sshll.u32 %s298, 4
          %s303 = int_to_ptr.hbm [resolvable:$true] %s302
          %305 = dma.vmem_to_hbm [thread:$0]  %s301, 64, %s303, %s287
        $region32: #{tpu_custom_call.1} parent=23 // pred_fallthru
          _
      $region24: #{tpu_custom_call.1} parent=5 // pred_fallthru
        _
      %p306 = scmp.le.s32.totalorder 2, %s13
      // Predicated region
      $region33: #{tpu_custom_call.1} parent=5 // pred_check
        %p307 = pneg %p306
      $region34: #{tpu_custom_call.1} parent=5 // pred_check_branch
        %309 = sbr.rel (%p307) target = $region36
      $region35: #{tpu_custom_call.1} parent=5 // pred_region
        %s310 = ssub.s32 %s13, 2
        // Predicated region
        $region37: #{tpu_custom_call.1} parent=35 // pred_check
          %p311 = pneg %p84
        $region38: #{tpu_custom_call.1} parent=35 // pred_check_branch
          %313 = sbr.rel (%p311) target = $region40
        $region39: #{tpu_custom_call.1} parent=35 // pred_region
          %s314 = sand.u32 %s69, 1
          %s315 = scalar_lea.sflag [#allocation4], %s314
          %s316 = sand.u32 %s69, 1
          %s317 = smul.addr %s316, 4
          %s318 = scalar_lea.vmem [#allocation5], %s317
          %320 = dma.done %s315, 64
        $region40: #{tpu_custom_call.1} parent=35 // pred_fallthru
          _
      $region36: #{tpu_custom_call.1} parent=5 // pred_fallthru
        _
    $region6: #{tpu_custom_call.1} parent=1 // loop_footer
      %s17 = sadd.s32 1, %s13
    $region7: #{tpu_custom_call.1} parent=1 // loop_footer_branch
      %12 = sbr.rel target = $region3
    $region8: #{tpu_custom_call.1} parent=1 // loop_exit
      _
    %321 = vsyncpa [#allocation3], 1
    %s322 = scalar_lea.sflag [#allocation3], 1
    %323 = vsyncpa %s322, 1
    %324 = vsyncpa [#allocation4], 1
    %s325 = scalar_lea.sflag [#allocation4], 1
    %326 = vsyncpa %s325, 1

</llo_original>
